<compile_context>
chip_gen: v5e
topology: v5e:2x2
jax: 0.10.0
libtpu: 0.0.40
codegen_flags: <defaults>
</compile_context>

<pallas_src>
import functools

import jax
import jax.numpy as jnp
from jax.experimental import pallas as pl
from jax.experimental.pallas import tpu as pltpu


def _encoder_kernel(x_ref, gt_ref, wih_ref, whd_ref, bih_ref, bhhn_ref, bdec_ref,
                    pred_ref, loss_ref,
                    h_scr, gh_scr, loss_scr, gi_scr,
                    *, steps, Tc, B, Bp, H, Gp, num_chunks):
    """One time-chunk of the GRU-encoder recurrence (grid axis = chunk index)."""
    c = pl.program_id(0)
    Pp = pred_ref.shape[-1]

    @pl.when(c == 0)
    def _init():
        h_scr[...] = jnp.zeros_like(h_scr)
        gh_scr[...] = jnp.zeros_like(gh_scr)
        loss_scr[...] = jnp.zeros_like(loss_scr)

    # Input-to-hidden projection for the whole chunk at once (one MXU matmul,
    # off the serial dependency chain), staged into VMEM scratch.
    gi_scr[...] = (jnp.dot(x_ref[...], wih_ref[...],
                           preferred_element_type=jnp.float32) + bih_ref[...])

    # Loop-invariant operands, hoisted once per chunk.
    whd = whd_ref[...]                                      # (H, Gp + Pp)
    bhh_n = jnp.broadcast_to(bhhn_ref[...], (Bp, H))        # (Bp, H)
    bdec = jnp.broadcast_to(bdec_ref[...], (Bp, Pp))        # (Bp, Pp)

    h = h_scr[...]            # (Bp, H)   hidden state, carried across chunks
    gh = gh_scr[...]          # (Bp, Gp)  h @ W_hh^T of current h, carried
    loss_acc = loss_scr[...]  # (Bp, Pp)  elementwise loss accumulator

    for j in range(Tc):       # static unroll bounded by the chunk size Tc
        gi = gi_scr[j * Bp:(j + 1) * Bp, :]                 # (Bp, Gp)

        # PyTorch GRUCell, gate order [r|z|n]; b_hh(r,z) pre-folded into gi.
        a = jax.nn.sigmoid(gi[:, :2 * H] + gh[:, :2 * H])   # fused r,z sigmoid
        r = a[:, :H]
        z = a[:, H:2 * H]
        n = jnp.tanh(gi[:, 2 * H:3 * H] + r * (gh[:, 2 * H:3 * H] + bhh_n))
        h = (1.0 - z) * n + z * h

        # Fused recurrent + decoder matmul: gates for the NEXT step and the
        # decoder output (pred) of the step just computed, in one MXU push.
        comb = jnp.dot(h.astype(whd.dtype), whd,
                       preferred_element_type=jnp.float32)  # (Bp, Gp + Pp)
        gh = comb[:, :Gp]
        pred = comb[:, Gp:] + bdec
        pred_ref[j * Bp:(j + 1) * Bp, :] = pred

        d = pred - gt_ref[j * Bp:(j + 1) * Bp, :]
        dd = d * d
        if (num_chunks - 1) * Tc + j >= steps:   # row may be step-padding
            dd = jnp.where(c * Tc + j < steps, dd, 0.0)
        loss_acc = loss_acc + dd

    h_scr[...] = h
    gh_scr[...] = gh
    loss_scr[...] = loss_acc

    @pl.when(c == num_chunks - 1)
    def _finalize():
        acc = loss_acc
        if B != Bp:  # mask zero-padded batch rows out of the loss (once)
            rows = jax.lax.broadcasted_iota(jnp.int32, (Bp, Pp), 0)
            acc = jnp.where(rows < B, acc, 0.0)
        loss_ref[...] = jnp.sum(acc, keepdims=True)


def _round_up(n, m):
    return ((n + m - 1) // m) * m


@functools.partial(jax.jit, static_argnames=("mxu_dtype", "time_chunk"))
def encoder_net_forward(x, gt, params, *, mxu_dtype=jnp.float32, time_chunk=16):
    """Returns (mse_loss, preds[T-1, B, obs_dim], hidden=None)."""
    T, B, I = x.shape
    H = params["w_hh_t"].shape[0]
    obs_dim = params["w_dec_t"].shape[1]
    steps = T - 1
    if steps < 1:
        raise ValueError("EncoderNet forward requires at least 2 timesteps.")

    G = 3 * H
    Gp = _round_up(G, 128)         # packed [r|z|n] gate block, padded once
    Pp = _round_up(obs_dim, 128)   # lane-dense decoder / pred / gt block
    Bp = _round_up(B, 8)           # sublane-aligned batch

    Tc = max(1, min(int(time_chunk), steps))
    num_chunks = -(-steps // Tc)
    steps_p = num_chunks * Tc
    TBp = Tc * Bp
    f32 = jnp.float32

    # --- weights (cheap one-time XLA ops; folded under jit) -----------------
    wih_p = jnp.pad(params["w_ih_t"], ((0, 0), (0, Gp - G))).astype(mxu_dtype)  # (I, Gp)
    whh_p = jnp.pad(params["w_hh_t"], ((0, 0), (0, Gp - G)))                    # (H, Gp)
    wdec_p = jnp.pad(params["w_dec_t"], ((0, 0), (0, Pp - obs_dim)))            # (H, Pp)
    whd = jnp.concatenate([whh_p, wdec_p], axis=1).astype(mxu_dtype)            # (H, Gp+Pp)

    b_ih, b_hh = params["b_ih"], params["b_hh"]
    bih_eff = jnp.concatenate([b_ih[:, :2 * H] + b_hh[:, :2 * H],   # fold b_hh(r,z)
                               b_ih[:, 2 * H:]], axis=1)
    bih_p = jnp.pad(bih_eff, ((0, 0), (0, Gp - G))).astype(f32)                 # (1, Gp)
    bhh_n = b_hh[:, 2 * H:].astype(f32)                                         # (1, H)
    bdec_p = jnp.pad(params["b_dec"], ((0, 0), (0, Pp - obs_dim))).astype(f32)  # (1, Pp)

    # --- inputs: fold (t, b), pad batch->Bp and steps->steps_p --------------
    xs = jnp.pad(x[:-1], ((0, steps_p - steps), (0, Bp - B), (0, 0)))
    x2d = xs.reshape(steps_p * Bp, I).astype(mxu_dtype)
    gts = jnp.pad(gt[1:], ((0, steps_p - steps), (0, Bp - B), (0, Pp - obs_dim)))
    gt2d = gts.reshape(steps_p * Bp, Pp).astype(f32)

    # --- VMEM budget / cost hints -------------------------------------------
    w_isz = jnp.dtype(mxu_dtype).itemsize
    est = (2 * TBp * (I * w_isz + 2 * Pp * 4)                 # x/gt/pred blocks, 2x buf
           + 2 * (I * Gp + H * (Gp + Pp)) * w_isz             # weights
           + TBp * Gp * 4 + 3 * Bp * max(Gp, Pp) * 4          # scratch
           + (2 * Gp + Pp + H) * 4)
    vmem_limit = int(min(64 * 1024 * 1024, max(32 * 1024 * 1024, 2 * est)))
    cost = pl.CostEstimate(
        flops=int(2 * steps * B * (I * G + H * (G + obs_dim))),
        transcendentals=int(steps * B * G),
        bytes_accessed=int(x2d.size * w_isz + gt2d.size * 4 + steps_p * Bp * Pp * 4
                           + (wih_p.size + whd.size) * w_isz),
    )

    kern = functools.partial(_encoder_kernel, steps=steps, Tc=Tc, B=B, Bp=Bp,
                             H=H, Gp=Gp, num_chunks=num_chunks)
    grid_spec = pltpu.PrefetchScalarGridSpec(
        num_scalar_prefetch=0,
        grid=(num_chunks,),
        in_specs=[
            pl.BlockSpec((TBp, I), lambda c: (c, 0)),          # x chunk
            pl.BlockSpec((TBp, Pp), lambda c: (c, 0)),         # gt chunk
            pl.BlockSpec((I, Gp), lambda c: (0, 0)),           # W_ih (resident)
            pl.BlockSpec((H, Gp + Pp), lambda c: (0, 0)),      # [W_hh | W_dec]
            pl.BlockSpec((1, Gp), lambda c: (0, 0)),           # b_ih (+ b_hh r,z)
            pl.BlockSpec((1, H), lambda c: (0, 0)),            # b_hh (n)
            pl.BlockSpec((1, Pp), lambda c: (0, 0)),           # b_dec
        ],
        out_specs=[
            pl.BlockSpec((TBp, Pp), lambda c: (c, 0)),         # preds chunk
            pl.BlockSpec((1, 1), lambda c: (0, 0)),            # loss
        ],
        scratch_shapes=[
            pltpu.VMEM((Bp, H), f32),       # h, carried across chunks
            pltpu.VMEM((Bp, Gp), f32),      # gh = h @ W_hh^T, carried
            pltpu.VMEM((Bp, Pp), f32),      # elementwise loss accumulator
            pltpu.VMEM((TBp, Gp), f32),     # staged per-chunk input projection
        ],
    )

    preds2d, loss = pl.pallas_call(
        kern,
        out_shape=(jax.ShapeDtypeStruct((steps_p * Bp, Pp), f32),
                   jax.ShapeDtypeStruct((1, 1), f32)),
        grid_spec=grid_spec,
        compiler_params=pltpu.CompilerParams(
            dimension_semantics=("arbitrary",),
            vmem_limit_bytes=vmem_limit),
        cost_estimate=cost,
    )(x2d, gt2d, wih_p, whd, bih_p, bhh_n, bdec_p)

    preds = preds2d.reshape(steps_p, Bp, Pp)[:steps, :B, :obs_dim]
    mse_loss = loss[0, 0]
    hidden = None  # jupyter=False path
    return mse_loss, preds, hidden


def _reference_forward(x, gt, params):
    """Pure-JAX reference (lax.scan GRUCell) for correctness checking."""
    H = params["w_hh_t"].shape[0]

    def cell(h, x_t):
        gi = x_t @ params["w_ih_t"] + params["b_ih"][0]
        gh = h @ params["w_hh_t"] + params["b_hh"][0]
        i_r, i_z, i_n = jnp.split(gi, 3, axis=-1)
        h_r, h_z, h_n = jnp.split(gh, 3, axis=-1)
        r = jax.nn.sigmoid(i_r + h_r)
        z = jax.nn.sigmoid(i_z + h_z)
        n = jnp.tanh(i_n + r * h_n)
        h_new = (1.0 - z) * n + z * h
        pred = h_new @ params["w_dec_t"] + params["b_dec"][0]
        return h_new, pred

    h0 = jnp.zeros((x.shape[1], H), jnp.float32)
    _, preds = jax.lax.scan(cell, h0, x[:-1])
    loss = jnp.sum((preds - gt[1:]) ** 2)
    return loss, preds


def make_params(key, input_size, hidden_size, obs_dim):
    """Deterministic synthetic parameters (uniform +/- 1/sqrt(H), like PyTorch)."""
    ks = jax.random.split(key, 6)
    bound = 1.0 / jnp.sqrt(hidden_size)
    u = lambda k, shape: jax.random.uniform(k, shape, jnp.float32, -bound, bound)
    return {
        "w_ih_t": u(ks[0], (input_size, 3 * hidden_size)),    # W_ih^T
        "w_hh_t": u(ks[1], (hidden_size, 3 * hidden_size)),   # W_hh^T
        "b_ih":   u(ks[2], (1, 3 * hidden_size)),
        "b_hh":   u(ks[3], (1, 3 * hidden_size)),
        "w_dec_t": u(ks[4], (hidden_size, obs_dim)),          # decoder W^T
        "b_dec":  u(ks[5], (1, obs_dim)),
    }


if __name__ == "__main__":
    # Small shapes consistent with the module: x = [T, B, obs_dim + act_dim]
    T, B = 8, 8
    obs_dim, act_dim = 4, 4
    input_size = obs_dim + act_dim
    hidden_size = 32

    key = jax.random.PRNGKey(0)
    kx, kg, kp = jax.random.split(key, 3)
    x = jax.random.normal(kx, (T, B, input_size), jnp.float32)
    gt = jax.random.normal(kg, (T, B, obs_dim), jnp.float32)
    params = make_params(kp, input_size, hidden_size, obs_dim)

    ref_loss, ref_preds = _reference_forward(x, gt, params)

    # 1) f32 MXU, two time chunks (exercises chunked grid + step-pad masking).
    mse_loss, preds, hidden = encoder_net_forward(
        x, gt, params, mxu_dtype=jnp.float32, time_chunk=4)
    jax.block_until_ready((mse_loss, preds))
    assert preds.shape == (T - 1, B, obs_dim)
    assert hidden is None
    assert jnp.allclose(preds, ref_preds, atol=5e-4, rtol=1e-4), "pred mismatch (f32)"
    assert jnp.allclose(mse_loss, ref_loss, atol=1e-2, rtol=1e-4), "loss mismatch (f32)"

    # 2) bf16 MXU operands (v6e/v7x native), f32 accumulation — looser tolerance.
    loss_bf, preds_bf, _ = encoder_net_forward(
        x, gt, params, mxu_dtype=jnp.bfloat16, time_chunk=8)
    jax.block_until_ready((loss_bf, preds_bf))
    assert jnp.allclose(preds_bf, ref_preds, atol=3e-2, rtol=3e-2), "pred mismatch (bf16)"
    assert jnp.allclose(loss_bf, ref_loss, atol=0.5, rtol=3e-2), "loss mismatch (bf16)"

    # 3) batch not a multiple of 8 (exercises batch padding + masked loss).
    x6, gt6 = x[:, :6], gt[:, :6]
    ref_loss6, ref_preds6 = _reference_forward(x6, gt6, params)
    loss6, preds6, _ = encoder_net_forward(
        x6, gt6, params, mxu_dtype=jnp.float32, time_chunk=4)
    jax.block_until_ready((loss6, preds6))
    assert preds6.shape == (T - 1, 6, obs_dim)
    assert jnp.allclose(preds6, ref_preds6, atol=5e-4, rtol=1e-4), "pred mismatch (B=6)"
    assert jnp.allclose(loss6, ref_loss6, atol=1e-2, rtol=1e-4), "loss mismatch (B=6)"

    print("KERNEL_OK")
</pallas_src>

<mosaic_0001>
module attributes {stable_mosaic.version = 11 : i64} {
  func.func @_encoder_kernel(%arg0: i32, %arg1: memref<32x8xf32, #tpu.memory_space<vmem>>, %arg2: memref<32x128xf32, #tpu.memory_space<vmem>>, %arg3: memref<8x128xf32, #tpu.memory_space<vmem>>, %arg4: memref<32x256xf32, #tpu.memory_space<vmem>>, %arg5: memref<1x128xf32, #tpu.memory_space<vmem>>, %arg6: memref<1x32xf32, #tpu.memory_space<vmem>>, %arg7: memref<1x128xf32, #tpu.memory_space<vmem>>, %arg8: memref<32x128xf32, #tpu.memory_space<vmem>>, %arg9: memref<1x1xf32, #tpu.memory_space<vmem>>, %arg10: memref<8x32xf32, #tpu.memory_space<vmem>>, %arg11: memref<8x128xf32, #tpu.memory_space<vmem>>, %arg12: memref<8x128xf32, #tpu.memory_space<vmem>>, %arg13: memref<32x128xf32, #tpu.memory_space<vmem>>) attributes {dimension_semantics = [#tpu.dimension_semantics<arbitrary>], iteration_bounds = array<i64: 2>, scalar_prefetch = 0 : i64, scratch_operands = 4 : i64, tpu.core_type = #tpu.core_type<tc>, window_params = [{transform_indices = @transform_0, window_bounds = array<i64: 32, 8>}, {transform_indices = @transform_1, window_bounds = array<i64: 32, 128>}, {pipeline_mode = #tpu.pipeline_mode<synchronous>, transform_indices = @transform_2, window_bounds = array<i64: 8, 128>}, {pipeline_mode = #tpu.pipeline_mode<synchronous>, transform_indices = @transform_3, window_bounds = array<i64: 32, 256>}, {pipeline_mode = #tpu.pipeline_mode<synchronous>, transform_indices = @transform_4, window_bounds = array<i64: 1, 128>}, {pipeline_mode = #tpu.pipeline_mode<synchronous>, transform_indices = @transform_5, window_bounds = array<i64: 1, 32>}, {pipeline_mode = #tpu.pipeline_mode<synchronous>, transform_indices = @transform_6, window_bounds = array<i64: 1, 128>}, {transform_indices = @transform_7, window_bounds = array<i64: 32, 128>}, {pipeline_mode = #tpu.pipeline_mode<synchronous>, transform_indices = @transform_8, window_bounds = array<i64: 1, 1>}]} {
    %c0_i32 = arith.constant 0 : i32
    %0 = arith.cmpi eq, %arg0, %c0_i32 : i32
    %1 = arith.extui %0 : i1 to i32
    %c0_i32_0 = arith.constant 0 : i32
    %2 = arith.cmpi ne, %1, %c0_i32_0 : i32
    scf.if %2 {
      %cst_61 = arith.constant 0.000000e+00 : f32
      %155 = vector.broadcast %cst_61 : f32 to vector<8x32xf32>
      %c0_62 = arith.constant 0 : index
      %c0_63 = arith.constant 0 : index
      %156 = vector.load %arg10[%c0_62, %c0_63] : memref<8x32xf32, #tpu.memory_space<vmem>>, vector<8x32xf32>
      tpu.vector_store %arg10[%c0_62, %c0_63], %155 {strides = array<i32>} : memref<8x32xf32, #tpu.memory_space<vmem>>, vector<8x32xf32>,
      %cst_64 = arith.constant 0.000000e+00 : f32
      %157 = vector.broadcast %cst_64 : f32 to vector<8x128xf32>
      %c0_65 = arith.constant 0 : index
      %c0_66 = arith.constant 0 : index
      %158 = vector.load %arg11[%c0_65, %c0_66] : memref<8x128xf32, #tpu.memory_space<vmem>>, vector<8x128xf32>
      tpu.vector_store %arg11[%c0_65, %c0_66], %157 {strides = array<i32>} : memref<8x128xf32, #tpu.memory_space<vmem>>, vector<8x128xf32>,
      %cst_67 = arith.constant 0.000000e+00 : f32
      %159 = vector.broadcast %cst_67 : f32 to vector<8x128xf32>
      %c0_68 = arith.constant 0 : index
      %c0_69 = arith.constant 0 : index
      %160 = vector.load %arg12[%c0_68, %c0_69] : memref<8x128xf32, #tpu.memory_space<vmem>>, vector<8x128xf32>
      tpu.vector_store %arg12[%c0_68, %c0_69], %159 {strides = array<i32>} : memref<8x128xf32, #tpu.memory_space<vmem>>, vector<8x128xf32>,
    } else {
    }
    %c0 = arith.constant 0 : index
    %c0_1 = arith.constant 0 : index
    %3 = vector.load %arg1[%c0, %c0_1] : memref<32x8xf32, #tpu.memory_space<vmem>>, vector<32x8xf32>
    %c0_2 = arith.constant 0 : index
    %c0_3 = arith.constant 0 : index
    %4 = vector.load %arg3[%c0_2, %c0_3] : memref<8x128xf32, #tpu.memory_space<vmem>>, vector<8x128xf32>
    %cst = arith.constant dense<0.000000e+00> : vector<32x128xf32>
    %5 = tpu.matmul %3, %4, %cst {dimension_numbers = #tpu.dot_dimension_numbers<[1], [0], [0], [1], [0, 0, 1, 1], [], []>} : vector<32x8xf32>, vector<8x128xf32>, vector<32x128xf32> -> vector<32x128xf32>
    %c0_4 = arith.constant 0 : index
    %c0_5 = arith.constant 0 : index
    %6 = vector.load %arg5[%c0_4, %c0_5] : memref<1x128xf32, #tpu.memory_space<vmem>>, vector<1x128xf32>
    %7 = vector.broadcast %6 : vector<1x128xf32> to vector<32x128xf32>
    %8 = arith.addf %5, %7 : vector<32x128xf32>
    %c0_6 = arith.constant 0 : index
    %c0_7 = arith.constant 0 : index
    %9 = vector.load %arg13[%c0_6, %c0_7] : memref<32x128xf32, #tpu.memory_space<vmem>>, vector<32x128xf32>
    tpu.vector_store %arg13[%c0_6, %c0_7], %8 {strides = array<i32>} : memref<32x128xf32, #tpu.memory_space<vmem>>, vector<32x128xf32>,
    %c0_8 = arith.constant 0 : index
    %c0_9 = arith.constant 0 : index
    %10 = vector.load %arg4[%c0_8, %c0_9] : memref<32x256xf32, #tpu.memory_space<vmem>>, vector<32x256xf32>
    %c0_10 = arith.constant 0 : index
    %c0_11 = arith.constant 0 : index
    %11 = vector.load %arg6[%c0_10, %c0_11] : memref<1x32xf32, #tpu.memory_space<vmem>>, vector<1x32xf32>
    %12 = vector.shape_cast %11 : vector<1x32xf32> to vector<1x32xf32>
    %13 = vector.broadcast %12 : vector<1x32xf32> to vector<8x32xf32>
    %c0_12 = arith.constant 0 : index
    %c0_13 = arith.constant 0 : index
    %14 = vector.load %arg7[%c0_12, %c0_13] : memref<1x128xf32, #tpu.memory_space<vmem>>, vector<1x128xf32>
    %15 = vector.shape_cast %14 : vector<1x128xf32> to vector<1x128xf32>
    %16 = vector.broadcast %15 : vector<1x128xf32> to vector<8x128xf32>
    %c0_14 = arith.constant 0 : index
    %c0_15 = arith.constant 0 : index
    %17 = vector.load %arg10[%c0_14, %c0_15] : memref<8x32xf32, #tpu.memory_space<vmem>>, vector<8x32xf32>
    %c0_16 = arith.constant 0 : index
    %c0_17 = arith.constant 0 : index
    %18 = vector.load %arg11[%c0_16, %c0_17] : memref<8x128xf32, #tpu.memory_space<vmem>>, vector<8x128xf32>
    %c0_18 = arith.constant 0 : index
    %c0_19 = arith.constant 0 : index
    %19 = vector.load %arg12[%c0_18, %c0_19] : memref<8x128xf32, #tpu.memory_space<vmem>>, vector<8x128xf32>
    %c0_20 = arith.constant 0 : index
    %c0_21 = arith.constant 0 : index
    %20 = vector.load %arg13[%c0_20, %c0_21] : memref<32x128xf32, #tpu.memory_space<vmem>>, vector<8x128xf32>
    %21 = vector.extract_strided_slice %20 {offsets = [0, 0], sizes = [8, 64], strides = [1, 1]} : vector<8x128xf32> to vector<8x64xf32>
    %22 = vector.extract_strided_slice %18 {offsets = [0, 0], sizes = [8, 64], strides = [1, 1]} : vector<8x128xf32> to vector<8x64xf32>
    %23 = arith.addf %21, %22 : vector<8x64xf32>
    %24 = arith.negf %23 : vector<8x64xf32>
    %25 = math.exp %24 : vector<8x64xf32>
    %cst_22 = arith.constant 1.000000e+00 : f32
    %26 = vector.broadcast %cst_22 : f32 to vector<8x64xf32>
    %27 = arith.addf %26, %25 : vector<8x64xf32>
    %28 = arith.divf %26, %27 : vector<8x64xf32>
    %29 = vector.extract_strided_slice %28 {offsets = [0, 0], sizes = [8, 32], strides = [1, 1]} : vector<8x64xf32> to vector<8x32xf32>
    %30 = vector.extract_strided_slice %28 {offsets = [0, 32], sizes = [8, 32], strides = [1, 1]} : vector<8x64xf32> to vector<8x32xf32>
    %31 = vector.extract_strided_slice %20 {offsets = [0, 64], sizes = [8, 32], strides = [1, 1]} : vector<8x128xf32> to vector<8x32xf32>
    %32 = vector.extract_strided_slice %18 {offsets = [0, 64], sizes = [8, 32], strides = [1, 1]} : vector<8x128xf32> to vector<8x32xf32>
    %33 = arith.addf %32, %13 : vector<8x32xf32>
    %34 = arith.mulf %29, %33 : vector<8x32xf32>
    %35 = arith.addf %31, %34 : vector<8x32xf32>
    %36 = math.tanh %35 : vector<8x32xf32>
    %cst_23 = arith.constant 1.000000e+00 : f32
    %37 = vector.broadcast %cst_23 : f32 to vector<8x32xf32>
    %38 = arith.subf %37, %30 : vector<8x32xf32>
    %39 = arith.mulf %38, %36 : vector<8x32xf32>
    %40 = arith.mulf %30, %17 : vector<8x32xf32>
    %41 = arith.addf %39, %40 : vector<8x32xf32>
    %cst_24 = arith.constant dense<0.000000e+00> : vector<8x256xf32>
    %42 = tpu.matmul %41, %10, %cst_24 {dimension_numbers = #tpu.dot_dimension_numbers<[1], [0], [0], [1], [0, 0, 1, 1], [], []>} : vector<8x32xf32>, vector<32x256xf32>, vector<8x256xf32> -> vector<8x256xf32>
    %43 = vector.extract_strided_slice %42 {offsets = [0, 0], sizes = [8, 128], strides = [1, 1]} : vector<8x256xf32> to vector<8x128xf32>
    %44 = vector.extract_strided_slice %42 {offsets = [0, 128], sizes = [8, 128], strides = [1, 1]} : vector<8x256xf32> to vector<8x128xf32>
    %45 = arith.addf %44, %16 : vector<8x128xf32>
    %c0_25 = arith.constant 0 : index
    %c0_26 = arith.constant 0 : index
    %46 = vector.load %arg8[%c0_25, %c0_26] : memref<32x128xf32, #tpu.memory_space<vmem>>, vector<8x128xf32>
    tpu.vector_store %arg8[%c0_25, %c0_26], %45 {strides = array<i32>} : memref<32x128xf32, #tpu.memory_space<vmem>>, vector<8x128xf32>,
    %c0_27 = arith.constant 0 : index
    %c0_28 = arith.constant 0 : index
    %47 = vector.load %arg2[%c0_27, %c0_28] : memref<32x128xf32, #tpu.memory_space<vmem>>, vector<8x128xf32>
    %48 = arith.subf %45, %47 : vector<8x128xf32>
    %49 = arith.mulf %48, %48 : vector<8x128xf32>
    %50 = arith.addf %19, %49 : vector<8x128xf32>
    %c8 = arith.constant 8 : index
    %c0_29 = arith.constant 0 : index
    %51 = vector.load %arg13[%c8, %c0_29] : memref<32x128xf32, #tpu.memory_space<vmem>>, vector<8x128xf32>
    %52 = vector.extract_strided_slice %51 {offsets = [0, 0], sizes = [8, 64], strides = [1, 1]} : vector<8x128xf32> to vector<8x64xf32>
    %53 = vector.extract_strided_slice %43 {offsets = [0, 0], sizes = [8, 64], strides = [1, 1]} : vector<8x128xf32> to vector<8x64xf32>
    %54 = arith.addf %52, %53 : vector<8x64xf32>
    %55 = arith.negf %54 : vector<8x64xf32>
    %56 = math.exp %55 : vector<8x64xf32>
    %cst_30 = arith.constant 1.000000e+00 : f32
    %57 = vector.broadcast %cst_30 : f32 to vector<8x64xf32>
    %58 = arith.addf %57, %56 : vector<8x64xf32>
    %59 = arith.divf %57, %58 : vector<8x64xf32>
    %60 = vector.extract_strided_slice %59 {offsets = [0, 0], sizes = [8, 32], strides = [1, 1]} : vector<8x64xf32> to vector<8x32xf32>
    %61 = vector.extract_strided_slice %59 {offsets = [0, 32], sizes = [8, 32], strides = [1, 1]} : vector<8x64xf32> to vector<8x32xf32>
    %62 = vector.extract_strided_slice %51 {offsets = [0, 64], sizes = [8, 32], strides = [1, 1]} : vector<8x128xf32> to vector<8x32xf32>
    %63 = vector.extract_strided_slice %43 {offsets = [0, 64], sizes = [8, 32], strides = [1, 1]} : vector<8x128xf32> to vector<8x32xf32>
    %64 = arith.addf %63, %13 : vector<8x32xf32>
    %65 = arith.mulf %60, %64 : vector<8x32xf32>
    %66 = arith.addf %62, %65 : vector<8x32xf32>
    %67 = math.tanh %66 : vector<8x32xf32>
    %cst_31 = arith.constant 1.000000e+00 : f32
    %68 = vector.broadcast %cst_31 : f32 to vector<8x32xf32>
    %69 = arith.subf %68, %61 : vector<8x32xf32>
    %70 = arith.mulf %69, %67 : vector<8x32xf32>
    %71 = arith.mulf %61, %41 : vector<8x32xf32>
    %72 = arith.addf %70, %71 : vector<8x32xf32>
    %cst_32 = arith.constant dense<0.000000e+00> : vector<8x256xf32>
    %73 = tpu.matmul %72, %10, %cst_32 {dimension_numbers = #tpu.dot_dimension_numbers<[1], [0], [0], [1], [0, 0, 1, 1], [], []>} : vector<8x32xf32>, vector<32x256xf32>, vector<8x256xf32> -> vector<8x256xf32>
    %74 = vector.extract_strided_slice %73 {offsets = [0, 0], sizes = [8, 128], strides = [1, 1]} : vector<8x256xf32> to vector<8x128xf32>
    %75 = vector.extract_strided_slice %73 {offsets = [0, 128], sizes = [8, 128], strides = [1, 1]} : vector<8x256xf32> to vector<8x128xf32>
    %76 = arith.addf %75, %16 : vector<8x128xf32>
    %c8_33 = arith.constant 8 : index
    %c0_34 = arith.constant 0 : index
    %77 = vector.load %arg8[%c8_33, %c0_34] : memref<32x128xf32, #tpu.memory_space<vmem>>, vector<8x128xf32>
    tpu.vector_store %arg8[%c8_33, %c0_34], %76 {strides = array<i32>} : memref<32x128xf32, #tpu.memory_space<vmem>>, vector<8x128xf32>,
    %c8_35 = arith.constant 8 : index
    %c0_36 = arith.constant 0 : index
    %78 = vector.load %arg2[%c8_35, %c0_36] : memref<32x128xf32, #tpu.memory_space<vmem>>, vector<8x128xf32>
    %79 = arith.subf %76, %78 : vector<8x128xf32>
    %80 = arith.mulf %79, %79 : vector<8x128xf32>
    %81 = arith.addf %50, %80 : vector<8x128xf32>
    %c16 = arith.constant 16 : index
    %c0_37 = arith.constant 0 : index
    %82 = vector.load %arg13[%c16, %c0_37] : memref<32x128xf32, #tpu.memory_space<vmem>>, vector<8x128xf32>
    %83 = vector.extract_strided_slice %82 {offsets = [0, 0], sizes = [8, 64], strides = [1, 1]} : vector<8x128xf32> to vector<8x64xf32>
    %84 = vector.extract_strided_slice %74 {offsets = [0, 0], sizes = [8, 64], strides = [1, 1]} : vector<8x128xf32> to vector<8x64xf32>
    %85 = arith.addf %83, %84 : vector<8x64xf32>
    %86 = arith.negf %85 : vector<8x64xf32>
    %87 = math.exp %86 : vector<8x64xf32>
    %cst_38 = arith.constant 1.000000e+00 : f32
    %88 = vector.broadcast %cst_38 : f32 to vector<8x64xf32>
    %89 = arith.addf %88, %87 : vector<8x64xf32>
    %90 = arith.divf %88, %89 : vector<8x64xf32>
    %91 = vector.extract_strided_slice %90 {offsets = [0, 0], sizes = [8, 32], strides = [1, 1]} : vector<8x64xf32> to vector<8x32xf32>
    %92 = vector.extract_strided_slice %90 {offsets = [0, 32], sizes = [8, 32], strides = [1, 1]} : vector<8x64xf32> to vector<8x32xf32>
    %93 = vector.extract_strided_slice %82 {offsets = [0, 64], sizes = [8, 32], strides = [1, 1]} : vector<8x128xf32> to vector<8x32xf32>
    %94 = vector.extract_strided_slice %74 {offsets = [0, 64], sizes = [8, 32], strides = [1, 1]} : vector<8x128xf32> to vector<8x32xf32>
    %95 = arith.addf %94, %13 : vector<8x32xf32>
    %96 = arith.mulf %91, %95 : vector<8x32xf32>
    %97 = arith.addf %93, %96 : vector<8x32xf32>
    %98 = math.tanh %97 : vector<8x32xf32>
    %cst_39 = arith.constant 1.000000e+00 : f32
    %99 = vector.broadcast %cst_39 : f32 to vector<8x32xf32>
    %100 = arith.subf %99, %92 : vector<8x32xf32>
    %101 = arith.mulf %100, %98 : vector<8x32xf32>
    %102 = arith.mulf %92, %72 : vector<8x32xf32>
    %103 = arith.addf %101, %102 : vector<8x32xf32>
    %cst_40 = arith.constant dense<0.000000e+00> : vector<8x256xf32>
    %104 = tpu.matmul %103, %10, %cst_40 {dimension_numbers = #tpu.dot_dimension_numbers<[1], [0], [0], [1], [0, 0, 1, 1], [], []>} : vector<8x32xf32>, vector<32x256xf32>, vector<8x256xf32> -> vector<8x256xf32>
    %105 = vector.extract_strided_slice %104 {offsets = [0, 0], sizes = [8, 128], strides = [1, 1]} : vector<8x256xf32> to vector<8x128xf32>
    %106 = vector.extract_strided_slice %104 {offsets = [0, 128], sizes = [8, 128], strides = [1, 1]} : vector<8x256xf32> to vector<8x128xf32>
    %107 = arith.addf %106, %16 : vector<8x128xf32>
    %c16_41 = arith.constant 16 : index
    %c0_42 = arith.constant 0 : index
    %108 = vector.load %arg8[%c16_41, %c0_42] : memref<32x128xf32, #tpu.memory_space<vmem>>, vector<8x128xf32>
    tpu.vector_store %arg8[%c16_41, %c0_42], %107 {strides = array<i32>} : memref<32x128xf32, #tpu.memory_space<vmem>>, vector<8x128xf32>,
    %c16_43 = arith.constant 16 : index
    %c0_44 = arith.constant 0 : index
    %109 = vector.load %arg2[%c16_43, %c0_44] : memref<32x128xf32, #tpu.memory_space<vmem>>, vector<8x128xf32>
    %110 = arith.subf %107, %109 : vector<8x128xf32>
    %111 = arith.mulf %110, %110 : vector<8x128xf32>
    %112 = arith.addf %81, %111 : vector<8x128xf32>
    %c24 = arith.constant 24 : index
    %c0_45 = arith.constant 0 : index
    %113 = vector.load %arg13[%c24, %c0_45] : memref<32x128xf32, #tpu.memory_space<vmem>>, vector<8x128xf32>
    %114 = vector.extract_strided_slice %113 {offsets = [0, 0], sizes = [8, 64], strides = [1, 1]} : vector<8x128xf32> to vector<8x64xf32>
    %115 = vector.extract_strided_slice %105 {offsets = [0, 0], sizes = [8, 64], strides = [1, 1]} : vector<8x128xf32> to vector<8x64xf32>
    %116 = arith.addf %114, %115 : vector<8x64xf32>
    %117 = arith.negf %116 : vector<8x64xf32>
    %118 = math.exp %117 : vector<8x64xf32>
    %cst_46 = arith.constant 1.000000e+00 : f32
    %119 = vector.broadcast %cst_46 : f32 to vector<8x64xf32>
    %120 = arith.addf %119, %118 : vector<8x64xf32>
    %121 = arith.divf %119, %120 : vector<8x64xf32>
    %122 = vector.extract_strided_slice %121 {offsets = [0, 0], sizes = [8, 32], strides = [1, 1]} : vector<8x64xf32> to vector<8x32xf32>
    %123 = vector.extract_strided_slice %121 {offsets = [0, 32], sizes = [8, 32], strides = [1, 1]} : vector<8x64xf32> to vector<8x32xf32>
    %124 = vector.extract_strided_slice %113 {offsets = [0, 64], sizes = [8, 32], strides = [1, 1]} : vector<8x128xf32> to vector<8x32xf32>
    %125 = vector.extract_strided_slice %105 {offsets = [0, 64], sizes = [8, 32], strides = [1, 1]} : vector<8x128xf32> to vector<8x32xf32>
    %126 = arith.addf %125, %13 : vector<8x32xf32>
    %127 = arith.mulf %122, %126 : vector<8x32xf32>
    %128 = arith.addf %124, %127 : vector<8x32xf32>
    %129 = math.tanh %128 : vector<8x32xf32>
    %cst_47 = arith.constant 1.000000e+00 : f32
    %130 = vector.broadcast %cst_47 : f32 to vector<8x32xf32>
    %131 = arith.subf %130, %123 : vector<8x32xf32>
    %132 = arith.mulf %131, %129 : vector<8x32xf32>
    %133 = arith.mulf %123, %103 : vector<8x32xf32>
    %134 = arith.addf %132, %133 : vector<8x32xf32>
    %cst_48 = arith.constant dense<0.000000e+00> : vector<8x256xf32>
    %135 = tpu.matmul %134, %10, %cst_48 {dimension_numbers = #tpu.dot_dimension_numbers<[1], [0], [0], [1], [0, 0, 1, 1], [], []>} : vector<8x32xf32>, vector<32x256xf32>, vector<8x256xf32> -> vector<8x256xf32>
    %136 = vector.extract_strided_slice %135 {offsets = [0, 0], sizes = [8, 128], strides = [1, 1]} : vector<8x256xf32> to vector<8x128xf32>
    %137 = vector.extract_strided_slice %135 {offsets = [0, 128], sizes = [8, 128], strides = [1, 1]} : vector<8x256xf32> to vector<8x128xf32>
    %138 = arith.addf %137, %16 : vector<8x128xf32>
    %c24_49 = arith.constant 24 : index
    %c0_50 = arith.constant 0 : index
    %139 = vector.load %arg8[%c24_49, %c0_50] : memref<32x128xf32, #tpu.memory_space<vmem>>, vector<8x128xf32>
    tpu.vector_store %arg8[%c24_49, %c0_50], %138 {strides = array<i32>} : memref<32x128xf32, #tpu.memory_space<vmem>>, vector<8x128xf32>,
    %c24_51 = arith.constant 24 : index
    %c0_52 = arith.constant 0 : index
    %140 = vector.load %arg2[%c24_51, %c0_52] : memref<32x128xf32, #tpu.memory_space<vmem>>, vector<8x128xf32>
    %141 = arith.subf %138, %140 : vector<8x128xf32>
    %142 = arith.mulf %141, %141 : vector<8x128xf32>
    %c4_i32 = arith.constant 4 : i32
    %143 = arith.muli %arg0, %c4_i32 : i32
    %c3_i32 = arith.constant 3 : i32
    %144 = arith.addi %143, %c3_i32 : i32
    %c7_i32 = arith.constant 7 : i32
    %145 = arith.cmpi slt, %144, %c7_i32 : i32
    %cst_53 = arith.constant 0.000000e+00 : f32
    %146 = vector.broadcast %cst_53 : f32 to vector<8x128xf32>
    %147 = arith.select %145, %142, %146 : vector<8x128xf32>
    %148 = arith.addf %112, %147 : vector<8x128xf32>
    %c0_54 = arith.constant 0 : index
    %c0_55 = arith.constant 0 : index
    %149 = vector.load %arg10[%c0_54, %c0_55] : memref<8x32xf32, #tpu.memory_space<vmem>>, vector<8x32xf32>
    tpu.vector_store %arg10[%c0_54, %c0_55], %134 {strides = array<i32>} : memref<8x32xf32, #tpu.memory_space<vmem>>, vector<8x32xf32>,
    %c0_56 = arith.constant 0 : index
    %c0_57 = arith.constant 0 : index
    %150 = vector.load %arg11[%c0_56, %c0_57] : memref<8x128xf32, #tpu.memory_space<vmem>>, vector<8x128xf32>
    tpu.vector_store %arg11[%c0_56, %c0_57], %136 {strides = array<i32>} : memref<8x128xf32, #tpu.memory_space<vmem>>, vector<8x128xf32>,
    %c0_58 = arith.constant 0 : index
    %c0_59 = arith.constant 0 : index
    %151 = vector.load %arg12[%c0_58, %c0_59] : memref<8x128xf32, #tpu.memory_space<vmem>>, vector<8x128xf32>
    tpu.vector_store %arg12[%c0_58, %c0_59], %148 {strides = array<i32>} : memref<8x128xf32, #tpu.memory_space<vmem>>, vector<8x128xf32>,
    %c1_i32 = arith.constant 1 : i32
    %152 = arith.cmpi eq, %arg0, %c1_i32 : i32
    %153 = arith.extui %152 : i1 to i32
    %c0_i32_60 = arith.constant 0 : i32
    %154 = arith.cmpi ne, %153, %c0_i32_60 : i32
    scf.if %154 {
      %155 = vector.shape_cast %148 : vector<8x128xf32> to vector<1x8x128xf32>
      %cst_61 = arith.constant dense<0.000000e+00> : vector<1xf32>
      %156 = vector.multi_reduction <add>, %155, %cst_61 [1, 2] : vector<1x8x128xf32> to vector<1xf32>
      %157 = vector.shape_cast %156 : vector<1xf32> to vector<1x1x1xf32>
      %158 = vector.extract %157[0, 0, 0] : f32 from vector<1x1x1xf32>
      %159 = vector.broadcast %158 : f32 to vector<1x1xf32>
      %c0_62 = arith.constant 0 : index
      %c0_63 = arith.constant 0 : index
      %160 = vector.load %arg9[%c0_62, %c0_63] : memref<1x1xf32, #tpu.memory_space<vmem>>, vector<1x1xf32>
      tpu.vector_store %arg9[%c0_62, %c0_63], %159 {strides = array<i32>} : memref<1x1xf32, #tpu.memory_space<vmem>>, vector<1x1xf32>,
    } else {
    }
    return
  }
  func.func @transform_0(%arg0: i32) -> (i32, i32) {
    %c0_i32 = arith.constant 0 : i32
    %c0_i32_0 = arith.constant 0 : i32
    return %arg0, %c0_i32 : i32, i32
  }
  func.func @transform_1(%arg0: i32) -> (i32, i32) {
    %c0_i32 = arith.constant 0 : i32
    %c0_i32_0 = arith.constant 0 : i32
    return %arg0, %c0_i32 : i32, i32
  }
  func.func @transform_2(%arg0: i32) -> (i32, i32) {
    %c0_i32 = arith.constant 0 : i32
    %c0_i32_0 = arith.constant 0 : i32
    %c0_i32_1 = arith.constant 0 : i32
    return %c0_i32, %c0_i32_0 : i32, i32
  }
  func.func @transform_3(%arg0: i32) -> (i32, i32) {
    %c0_i32 = arith.constant 0 : i32
    %c0_i32_0 = arith.constant 0 : i32
    %c0_i32_1 = arith.constant 0 : i32
    return %c0_i32, %c0_i32_0 : i32, i32
  }
  func.func @transform_4(%arg0: i32) -> (i32, i32) {
    %c0_i32 = arith.constant 0 : i32
    %c0_i32_0 = arith.constant 0 : i32
    %c0_i32_1 = arith.constant 0 : i32
    return %c0_i32, %c0_i32_0 : i32, i32
  }
  func.func @transform_5(%arg0: i32) -> (i32, i32) {
    %c0_i32 = arith.constant 0 : i32
    %c0_i32_0 = arith.constant 0 : i32
    %c0_i32_1 = arith.constant 0 : i32
    return %c0_i32, %c0_i32_0 : i32, i32
  }
  func.func @transform_6(%arg0: i32) -> (i32, i32) {
    %c0_i32 = arith.constant 0 : i32
    %c0_i32_0 = arith.constant 0 : i32
    %c0_i32_1 = arith.constant 0 : i32
    return %c0_i32, %c0_i32_0 : i32, i32
  }
  func.func @transform_7(%arg0: i32) -> (i32, i32) {
    %c0_i32 = arith.constant 0 : i32
    %c0_i32_0 = arith.constant 0 : i32
    return %arg0, %c0_i32 : i32, i32
  }
  func.func @transform_8(%arg0: i32) -> (i32, i32) {
    %c0_i32 = arith.constant 0 : i32
    %c0_i32_0 = arith.constant 0 : i32
    %c0_i32_1 = arith.constant 0 : i32
    return %c0_i32, %c0_i32_0 : i32, i32
  }
}

</mosaic_0001>

<llo_original>
// kernel: encoder_net_forward.1
$region0: #{encoder_net_forward.1}
  #allocation0 [shape = 'u32[]', space=smem, size = 0x4, offset = 0x4, fixed_abs, tag = 'smem constant byte address 0x4 - core index']
  #allocation1 [shape = 'u32[72,128]{1,0:T(1,128)}', space=vmem, size = 0x9000, scoped, tag = 'internal scratch']
  #allocation2 [shape = 'f32[8,32]{1,0:T(8,128)}', space=vmem, size = 0x1000, scoped, tag = 'scratch operand']
  #allocation3 [shape = 'f32[8,128]{1,0:T(8,128)}', space=vmem, size = 0x1000, scoped, tag = 'scratch operand']
  #allocation4 [shape = 'f32[8,128]{1,0:T(8,128)}', space=vmem, size = 0x1000, scoped, tag = 'scratch operand']
  #allocation5 [shape = 'f32[32,128]{1,0:T(8,128)}', space=vmem, size = 0x4000, scoped, tag = 'scratch operand']
  %s0 = inlined_call_operand.vmem [shape: f32[64,8], index: 0, kind: input, shape index: {}]
  %s1 = inlined_call_operand.vmem [shape: f32[64,128], index: 1, kind: input, shape index: {}]
  %s2 = inlined_call_operand.vmem [shape: f32[8,128], index: 2, kind: input, shape index: {}]
  %s3 = inlined_call_operand.vmem [shape: f32[32,256], index: 3, kind: input, shape index: {}]
  %s4 = inlined_call_operand.vmem [shape: f32[1,128], index: 4, kind: input, shape index: {}]
  %s5 = inlined_call_operand.vmem [shape: f32[1,32], index: 5, kind: input, shape index: {}]
  %s6 = inlined_call_operand.vmem [shape: f32[1,128], index: 6, kind: input, shape index: {}]
  %s7 = inlined_call_operand.vmem [shape: f32[64,128], index: 7, kind: output, shape index: {0}]
  %s8 = inlined_call_operand.hbm [shape: f32[1,1], index: 8, kind: output, shape index: {1}]
  %9 = xla_tuple %s7, %s8
  %s10 = sld [smem:[#allocation0]]
  $region77: #{encoder_net_forward.1} parent=0
    _
  %s12 = ssub.s32 1, %s10
  %s13 = scalar_select 0, %s12, %s10
  $region1: #{encoder_net_forward.1} parent=0
    #allocation6 [shape = 'u8[512]{0}', space=vmem, size = 0x400, scoped, tag = 'output window, operand 1, single buffered']
    #allocation7 [shape = 's32[2]{0}', space=sflag, size = 0x8, scoped, tag = 'scoped memory for encoder_net_forward.1']
    %14 = vsyncpa [#allocation7], 0
    loop: start=0, step=1, limit=4
    $region2: #{encoder_net_forward.1} parent=1 // loop_pre_header
      _
    $region3: #{encoder_net_forward.1} parent=1 // loop_header
      %s16 = sphi 0, %s20
      %p17 = scmp.ge.s32.totalorder %s16, 4
      %s26 = sphi 0, %s28
      %s29 = sphi 0, %s26
      %s30 = sphi 0, %s29
      %s46 = sphi 0, %s30
      %s52 = sphi 0, %s54
      %s55 = sphi 0, %s52
      %s56 = sphi 0, %s55
      %s72 = sphi 0, %s56
      %s76 = sphi 0, %s76
      %s78 = sphi 0, %s76
      %s79 = sphi 0, %s78
      %s93 = sphi 0, %s79
      %s97 = sphi 0, %s97
      %s99 = sphi 0, %s97
      %s100 = sphi 0, %s99
      %s114 = sphi 0, %s100
      %s118 = sphi 0, %s118
      %s120 = sphi 0, %s118
      %s121 = sphi 0, %s120
      %s135 = sphi 0, %s121
      %s139 = sphi 0, %s139
      %s141 = sphi 0, %s139
      %s142 = sphi 0, %s141
      %s156 = sphi 0, %s142
      %s160 = sphi 0, %s160
      %s162 = sphi 0, %s160
      %s163 = sphi 0, %s162
      %s177 = sphi 0, %s163
      %s183 = sphi 0, %s185
      %s186 = sphi 0, %s183
      %s187 = sphi 0, %s186
      %s203 = sphi 0, %s187
      %s207 = sphi 0, %s207
      %s209 = sphi 0, %s207
      %s210 = sphi 0, %s209
      %s224 = sphi 0, %s210
    $region4: #{encoder_net_forward.1} parent=1 // loop_header_branch
      %19 = sbr.rel (%p17) target = $region8
    $region5: #{encoder_net_forward.1} parent=1 // loop_body
      %s21 = ssub.s32 %s16, 1
      %s22 = ssub.s32 %s16, 2
      %s23 = sadd.s32 %s16, 1
      %s24 = ssub.s32 %s16, %s23
      %p25 = scmp.eq.s32.totalorder %s24, 0
      %s27 = sadd.s32 %s26, 1
      %s28 = scalar_select %p25, %s26, %s27
      %p31 = pneg %p25
      %p32 = scmp.eq.s32.totalorder %s16, 1
      %p33 = por %p31, %p32
      %p34 = scmp.ne.s32.totalorder %s26, %s29
      %p35 = scmp.eq.s32.totalorder %s16, 0
      %p36 = por %p34, %p35
      %p37 = scmp.ne.s32.totalorder %s26, %s29
      %p38 = scmp.eq.s32.totalorder %s21, 1
      %p39 = por %p37, %p38
      %p40 = scmp.ne.s32.totalorder %s29, %s30
      %p41 = scmp.eq.s32.totalorder %s21, 0
      %p42 = por %p40, %p41
      %p43 = scmp.ne.s32.totalorder %s29, %s30
      %p44 = scmp.eq.s32.totalorder %s22, 1
      %p45 = por %p43, %p44
      %p47 = scmp.ne.s32.totalorder %s30, %s46
      %p48 = scmp.eq.s32.totalorder %s22, 0
      %p49 = por %p47, %p48
      %s50 = ssub.s32 %s16, %s23
      %p51 = scmp.eq.s32.totalorder %s50, 0
      %s53 = sadd.s32 %s52, 1
      %s54 = scalar_select %p51, %s52, %s53
      %p57 = pneg %p51
      %p58 = scmp.eq.s32.totalorder %s16, 1
      %p59 = por %p57, %p58
      %p60 = scmp.ne.s32.totalorder %s52, %s55
      %p61 = scmp.eq.s32.totalorder %s16, 0
      %p62 = por %p60, %p61
      %p63 = scmp.ne.s32.totalorder %s52, %s55
      %p64 = scmp.eq.s32.totalorder %s21, 1
      %p65 = por %p63, %p64
      %p66 = scmp.ne.s32.totalorder %s55, %s56
      %p67 = scmp.eq.s32.totalorder %s21, 0
      %p68 = por %p66, %p67
      %p69 = scmp.ne.s32.totalorder %s55, %s56
      %p70 = scmp.eq.s32.totalorder %s22, 1
      %p71 = por %p69, %p70
      %p73 = scmp.ne.s32.totalorder %s56, %s72
      %p74 = scmp.eq.s32.totalorder %s22, 0
      %p75 = por %p73, %p74
      %s77 = sadd.s32 %s76, 1
      %p80 = scmp.eq.s32.totalorder %s16, 1
      %p81 = scmp.ne.s32.totalorder %s76, %s78
      %p82 = scmp.eq.s32.totalorder %s16, 0
      %p83 = por %p81, %p82
      %p84 = scmp.ne.s32.totalorder %s76, %s78
      %p85 = scmp.eq.s32.totalorder %s21, 1
      %p86 = por %p84, %p85
      %p87 = scmp.ne.s32.totalorder %s78, %s79
      %p88 = scmp.eq.s32.totalorder %s21, 0
      %p89 = por %p87, %p88
      %p90 = scmp.ne.s32.totalorder %s78, %s79
      %p91 = scmp.eq.s32.totalorder %s22, 1
      %p92 = por %p90, %p91
      %p94 = scmp.ne.s32.totalorder %s79, %s93
      %p95 = scmp.eq.s32.totalorder %s22, 0
      %p96 = por %p94, %p95
      %s98 = sadd.s32 %s97, 1
      %p101 = scmp.eq.s32.totalorder %s16, 1
      %p102 = scmp.ne.s32.totalorder %s97, %s99
      %p103 = scmp.eq.s32.totalorder %s16, 0
      %p104 = por %p102, %p103
      %p105 = scmp.ne.s32.totalorder %s97, %s99
      %p106 = scmp.eq.s32.totalorder %s21, 1
      %p107 = por %p105, %p106
      %p108 = scmp.ne.s32.totalorder %s99, %s100
      %p109 = scmp.eq.s32.totalorder %s21, 0
      %p110 = por %p108, %p109
      %p111 = scmp.ne.s32.totalorder %s99, %s100
      %p112 = scmp.eq.s32.totalorder %s22, 1
      %p113 = por %p111, %p112
      %p115 = scmp.ne.s32.totalorder %s100, %s114
      %p116 = scmp.eq.s32.totalorder %s22, 0
      %p117 = por %p115, %p116
      %s119 = sadd.s32 %s118, 1
      %p122 = scmp.eq.s32.totalorder %s16, 1
      %p123 = scmp.ne.s32.totalorder %s118, %s120
      %p124 = scmp.eq.s32.totalorder %s16, 0
      %p125 = por %p123, %p124
      %p126 = scmp.ne.s32.totalorder %s118, %s120
      %p127 = scmp.eq.s32.totalorder %s21, 1
      %p128 = por %p126, %p127
      %p129 = scmp.ne.s32.totalorder %s120, %s121
      %p130 = scmp.eq.s32.totalorder %s21, 0
      %p131 = por %p129, %p130
      %p132 = scmp.ne.s32.totalorder %s120, %s121
      %p133 = scmp.eq.s32.totalorder %s22, 1
      %p134 = por %p132, %p133
      %p136 = scmp.ne.s32.totalorder %s121, %s135
      %p137 = scmp.eq.s32.totalorder %s22, 0
      %p138 = por %p136, %p137
      %s140 = sadd.s32 %s139, 1
      %p143 = scmp.eq.s32.totalorder %s16, 1
      %p144 = scmp.ne.s32.totalorder %s139, %s141
      %p145 = scmp.eq.s32.totalorder %s16, 0
      %p146 = por %p144, %p145
      %p147 = scmp.ne.s32.totalorder %s139, %s141
      %p148 = scmp.eq.s32.totalorder %s21, 1
      %p149 = por %p147, %p148
      %p150 = scmp.ne.s32.totalorder %s141, %s142
      %p151 = scmp.eq.s32.totalorder %s21, 0
      %p152 = por %p150, %p151
      %p153 = scmp.ne.s32.totalorder %s141, %s142
      %p154 = scmp.eq.s32.totalorder %s22, 1
      %p155 = por %p153, %p154
      %p157 = scmp.ne.s32.totalorder %s142, %s156
      %p158 = scmp.eq.s32.totalorder %s22, 0
      %p159 = por %p157, %p158
      %s161 = sadd.s32 %s160, 1
      %p164 = scmp.eq.s32.totalorder %s16, 1
      %p165 = scmp.ne.s32.totalorder %s160, %s162
      %p166 = scmp.eq.s32.totalorder %s16, 0
      %p167 = por %p165, %p166
      %p168 = scmp.ne.s32.totalorder %s160, %s162
      %p169 = scmp.eq.s32.totalorder %s21, 1
      %p170 = por %p168, %p169
      %p171 = scmp.ne.s32.totalorder %s162, %s163
      %p172 = scmp.eq.s32.totalorder %s21, 0
      %p173 = por %p171, %p172
      %p174 = scmp.ne.s32.totalorder %s162, %s163
      %p175 = scmp.eq.s32.totalorder %s22, 1
      %p176 = por %p174, %p175
      %p178 = scmp.ne.s32.totalorder %s163, %s177
      %p179 = scmp.eq.s32.totalorder %s22, 0
      %p180 = por %p178, %p179
      %s181 = ssub.s32 %s16, %s23
      %p182 = scmp.eq.s32.totalorder %s181, 0
      %s184 = sadd.s32 %s183, 1
      %s185 = scalar_select %p182, %s183, %s184
      %p188 = pneg %p182
      %p189 = scmp.eq.s32.totalorder %s16, 1
      %p190 = por %p188, %p189
      %p191 = scmp.ne.s32.totalorder %s183, %s186
      %p192 = scmp.eq.s32.totalorder %s16, 0
      %p193 = por %p191, %p192
      %p194 = scmp.ne.s32.totalorder %s183, %s186
      %p195 = scmp.eq.s32.totalorder %s21, 1
      %p196 = por %p194, %p195
      %p197 = scmp.ne.s32.totalorder %s186, %s187
      %p198 = scmp.eq.s32.totalorder %s21, 0
      %p199 = por %p197, %p198
      %p200 = scmp.ne.s32.totalorder %s186, %s187
      %p201 = scmp.eq.s32.totalorder %s22, 1
      %p202 = por %p200, %p201
      %p204 = scmp.ne.s32.totalorder %s187, %s203
      %p205 = scmp.eq.s32.totalorder %s22, 0
      %p206 = por %p204, %p205
      %s208 = sadd.s32 %s207, 1
      %p211 = scmp.eq.s32.totalorder %s16, 1
      %p212 = scmp.ne.s32.totalorder %s207, %s209
      %p213 = scmp.eq.s32.totalorder %s16, 0
      %p214 = por %p212, %p213
      %p215 = scmp.ne.s32.totalorder %s207, %s209
      %p216 = scmp.eq.s32.totalorder %s21, 1
      %p217 = por %p215, %p216
      %p218 = scmp.ne.s32.totalorder %s209, %s210
      %p219 = scmp.eq.s32.totalorder %s21, 0
      %p220 = por %p218, %p219
      %p221 = scmp.ne.s32.totalorder %s209, %s210
      %p222 = scmp.eq.s32.totalorder %s22, 1
      %p223 = por %p221, %p222
      %p225 = scmp.ne.s32.totalorder %s210, %s224
      %p226 = scmp.eq.s32.totalorder %s22, 0
      %p227 = por %p225, %p226
      %p228 = scmp.le.s32.totalorder 1, %s16
      %p229 = scmp.lt.s32.totalorder %s16, 3
      %p230 = pnand %p228, %p229
      %p231 = pneg %p230
      // Predicated region
      $region9: #{encoder_net_forward.1} parent=5 // pred_check
        _
      $region10: #{encoder_net_forward.1} parent=5 // pred_check_branch
        %233 = sbr.rel (%p230) target = $region12
      $region11: #{encoder_net_forward.1} parent=5 // pred_region
        %s234 = ssub.s32 %s16, 1
        // Predicated region
        $region13: #{encoder_net_forward.1} parent=11 // pred_check
          %p235 = pneg %p89
        $region14: #{encoder_net_forward.1} parent=11 // pred_check_branch
          %237 = sbr.rel (%p235) target = $region16
        $region15: #{encoder_net_forward.1} parent=11 // pred_region
          _
        $region16: #{encoder_net_forward.1} parent=11 // pred_fallthru
          _
        // Predicated region
        $region17: #{encoder_net_forward.1} parent=11 // pred_check
          %p238 = pneg %p110
        $region18: #{encoder_net_forward.1} parent=11 // pred_check_branch
          %240 = sbr.rel (%p238) target = $region20
        $region19: #{encoder_net_forward.1} parent=11 // pred_region
          _
        $region20: #{encoder_net_forward.1} parent=11 // pred_fallthru
          _
        // Predicated region
        $region21: #{encoder_net_forward.1} parent=11 // pred_check
          %p241 = pneg %p131
        $region22: #{encoder_net_forward.1} parent=11 // pred_check_branch
          %243 = sbr.rel (%p241) target = $region24
        $region23: #{encoder_net_forward.1} parent=11 // pred_region
          _
        $region24: #{encoder_net_forward.1} parent=11 // pred_fallthru
          _
        // Predicated region
        $region25: #{encoder_net_forward.1} parent=11 // pred_check
          %p244 = pneg %p152
        $region26: #{encoder_net_forward.1} parent=11 // pred_check_branch
          %246 = sbr.rel (%p244) target = $region28
        $region27: #{encoder_net_forward.1} parent=11 // pred_region
          _
        $region28: #{encoder_net_forward.1} parent=11 // pred_fallthru
          _
        // Predicated region
        $region29: #{encoder_net_forward.1} parent=11 // pred_check
          %p247 = pneg %p173
        $region30: #{encoder_net_forward.1} parent=11 // pred_check_branch
          %249 = sbr.rel (%p247) target = $region32
        $region31: #{encoder_net_forward.1} parent=11 // pred_region
          _
        $region32: #{encoder_net_forward.1} parent=11 // pred_fallthru
          _
      $region12: #{encoder_net_forward.1} parent=5 // pred_fallthru
        _
      %p250 = scmp.lt.s32.totalorder %s16, 2
      // Predicated region
      $region33: #{encoder_net_forward.1} parent=5 // pred_check
        %p251 = pneg %p250
      $region34: #{encoder_net_forward.1} parent=5 // pred_check_branch
        %253 = sbr.rel (%p251) target = $region36
      $region35: #{encoder_net_forward.1} parent=5 // pred_region
        // Predicated region
        $region37: #{encoder_net_forward.1} parent=35 // pred_check
          %p254 = pneg %p36
        $region38: #{encoder_net_forward.1} parent=35 // pred_check_branch
          %256 = sbr.rel (%p254) target = $region40
        $region39: #{encoder_net_forward.1} parent=35 // pred_region
          %s257 = smul.u32 4, %s16
          %p258 = scmp.lt.s32.totalorder %s257, 7
          %s259 = scalar_select %p258, %s257, 7
          %s260 = smul.addr %s259, 8
          %s261 = scalar_lea.vmem %s0, %s260
          %s262 = smul.u32 4, %s16
        $region40: #{encoder_net_forward.1} parent=35 // pred_fallthru
          _
        // Predicated region
        $region41: #{encoder_net_forward.1} parent=35 // pred_check
          %p263 = pneg %p62
        $region42: #{encoder_net_forward.1} parent=35 // pred_check_branch
          %265 = sbr.rel (%p263) target = $region44
        $region43: #{encoder_net_forward.1} parent=35 // pred_region
          %s266 = smul.u32 4, %s16
          %p267 = scmp.lt.s32.totalorder %s266, 7
          %s268 = scalar_select %p267, %s266, 7
          %s269 = smul.addr %s268, 8
          %s270 = scalar_lea.vmem %s1, %s269
          %s271 = smul.u32 4, %s16
        $region44: #{encoder_net_forward.1} parent=35 // pred_fallthru
          _
      $region36: #{encoder_net_forward.1} parent=5 // pred_fallthru
        _
      %p272 = scmp.le.s32.totalorder 1, %s16
      %p273 = scmp.lt.s32.totalorder %s16, 3
      %p274 = pnand %p272, %p273
      %p275 = pneg %p274
      // Predicated region
      $region45: #{encoder_net_forward.1} parent=5 // pred_check
        _
      $region46: #{encoder_net_forward.1} parent=5 // pred_check_branch
        %277 = sbr.rel (%p274) target = $region48
      $region47: #{encoder_net_forward.1} parent=5 // pred_region
        %s278 = ssub.s32 %s16, 1
        %s279 = smul.u32 4, %s21
        %p280 = scmp.lt.s32.totalorder %s279, 7
        %s281 = scalar_select %p280, %s279, 7
        %s282 = smul.addr %s281, 8
        %s283 = scalar_lea.vmem %s0, %s282
        %p284 = pneg %p42
        %p285 = pneg %p39
        %s286 = smul.u32 4, %s21
        %p287 = scmp.lt.s32.totalorder %s286, 7
        %s288 = scalar_select %p287, %s286, 7
        %s289 = smul.addr %s288, 8
        %s290 = scalar_lea.vmem %s1, %s289
        %p291 = pneg %p68
        %p292 = pneg %p65
        %p293 = pneg %p89
        %p294 = pneg %p86
        %p295 = pneg %p110
        %p296 = pneg %p107
        %p297 = pneg %p131
        %p298 = pneg %p128
        %p299 = pneg %p152
        %p300 = pneg %p149
        %p301 = pneg %p173
        %p302 = pneg %p170
        %p303 = pneg %p199
        %p304 = pneg %p196
        %s305 = smul.u32 4, %s21
        %p306 = scmp.lt.s32.totalorder %s305, 7
        %s307 = scalar_select %p306, %s305, 7
        %s308 = smul.addr %s307, 8
        %s309 = scalar_lea.vmem %s7, %s308
        %p310 = pneg %p220
        %p311 = pneg %p217
        %s312 = smul.u32 4, %s21
        %p313 = scmp.lt.s32.totalorder %s312, 7
        %s314 = scalar_select %p313, %s312, 7
        %s315 = smul.addr %s314, 8
        %s316 = scalar_lea.vmem %s0, %s315
        %s317 = smul.u32 4, %s21
        %s318 = smul.u32 4, %s21
        %p319 = scmp.lt.s32.totalorder %s318, 7
        %s320 = scalar_select %p319, %s318, 7
        %s321 = smul.addr %s320, 8
        %s322 = scalar_lea.vmem %s1, %s321
        %s323 = smul.u32 4, %s21
        %s324 = smul.u32 4, %s21
        %p325 = scmp.lt.s32.totalorder %s324, 7
        %s326 = scalar_select %p325, %s324, 7
        %s327 = smul.addr %s326, 8
        %s328 = scalar_lea.vmem %s7, %s327
        %s329 = smul.u32 4, %s21
        %p330 = scmp.eq.s32.totalorder %s21, 0
        // Predicated region
        $region49: #{encoder_net_forward.1} parent=47 // pred_check
          %p331 = pneg %p330
        $region50: #{encoder_net_forward.1} parent=47 // pred_check_branch
          %333 = sbr.rel (%p331) target = $region52
        $region51: #{encoder_net_forward.1} parent=47 // pred_region
          %vm334 = vcmask 261120
          %335 = vst.msk [vmem:[#allocation2] sm:$0xff] %vm334, 0.0
          %336 = vst [vmem:[#allocation3] sm:$0xff] 0.0
          %337 = vst [vmem:[#allocation4] sm:$0xff] 0.0
        $region52: #{encoder_net_forward.1} parent=47 // pred_fallthru
          _
        %v338 = vld [vmem:[%s316] sm:$0xff]
        %v339 = vld [vmem:[%s316 + $0x8] sm:$0xff]
        %v340 = vld [vmem:[%s316 + $0x10] sm:$0xff]
        %v341 = vld [vmem:[%s316 + $0x18] sm:$0xff]
        %v342 = vld [vmem:[%s2] sm:$0xff]
        %v343 = vld [vmem:[%s4] sm:$0x1]
        %v345 = vperm.slane %v343, 0
        %vm347 = vcmask 64512
        %v349 = vsel %vm347, %v338, 0
        %v352 = vsel %vm347, %v339, 0
        %v355 = vsel %vm347, %v340, 0
        %v358 = vsel %vm347, %v341, 0
        %360 = vmatpush.msra.mxu0 0.0
        %361 = vmatpush.msra.mxu0 0.0
        %362 = vmatpush.msra.mxu0 0.0
        %363 = vmatpush.msra.mxu0 0.0
        %364 = vmatpush.msra.mxu0 0.0
        %365 = vmatpush.msra.mxu0 0.0
        %366 = vmatpush.msra.mxu0 0.0
        %367 = vmatpush.msra.mxu0 0.0
        %368 = vmatpush.msra.mxu0 0.0
        %369 = vmatpush.msra.mxu0 0.0
        %370 = vmatpush.msra.mxu0 0.0
        %371 = vmatpush.msra.mxu0 0.0
        %372 = vmatpush.msra.mxu0 0.0
        %373 = vmatpush.msra.mxu0 0.0
        %374 = vmatpush.msra.mxu0 0.0
        %375 = vmatpush.msra.mxu0 %v342
        %376 = vmatmul.f32.gmra.mxu0 %v349
        %v377 = vpop.f32.mrf.mxu0
        %v378 = vadd.f32 %v345, %v377
        %379 = vmatmul.f32.gmra.mxu0 %v352
        %v380 = vpop.f32.mrf.mxu0
        %v381 = vadd.f32 %v345, %v380
        %382 = vmatmul.f32.gmra.mxu0 %v355
        %v383 = vpop.f32.mrf.mxu0
        %v384 = vadd.f32 %v345, %v383
        %385 = vmatmul.f32.gmra.mxu0 %v358
        %v386 = vpop.f32.mrf.mxu0
        %v387 = vadd.f32 %v345, %v386
        %388 = vdwg.mxu0
        %389 = vst [vmem:[#allocation5] sm:$0xff] %v378
        %390 = vst [vmem:[#allocation5 + $0x8] sm:$0xff] %v381
        %391 = vst [vmem:[#allocation5 + $0x10] sm:$0xff] %v384
        %392 = vst [vmem:[#allocation5 + $0x18] sm:$0xff] %v387
        %v393 = vld [vmem:[%s3] sm:$0xff]
        %v394 = vld [vmem:[%s3 + $0x8] sm:$0xff]
        %v395 = vld [vmem:[%s3 + $0x10] sm:$0xff]
        %v396 = vld [vmem:[%s3 + $0x18] sm:$0xff]
        %v397 = vld [vmem:[%s3 + $0x20] sm:$0xff]
        %v398 = vld [vmem:[%s3 + $0x28] sm:$0xff]
        %v399 = vld [vmem:[%s3 + $0x30] sm:$0xff]
        %v400 = vld [vmem:[%s3 + $0x38] sm:$0xff]
        %v401 = vld [vmem:[%s5] sm:$0x1]
        %v403 = vperm.slane %v401, 0
        %v404 = vld [vmem:[%s6] sm:$0x1]
        %v406 = vperm.slane %v404, 0
        %v408 = vld [vmem:[#allocation2] sm:$0xff]
        %v409 = vld [vmem:[#allocation3] sm:$0xff]
        %v410 = vld [vmem:[#allocation4] sm:$0xff]
        %v411 = vld [vmem:[#allocation5] sm:$0xff]
        %v412 = vadd.f32 %v411, %v409
        %v413 = vxor.u32 %v412, 2147483648
        %v414 = vmul.f32 %v413, 1.442695
        %v415 = vpow.pop %v414
        %v416 = vadd.f32 %v415, 1.0
        %v417 = vrcp.pop %v416
        %v418 = vmul.f32 %v416, %v417
        %v419 = vsub.f32 1.0, %v418
        %v420 = vmul.f32 %v417, %v419
        %v421 = vadd.f32 %v417, %v420
        %vm422 = vweird.f32 %v416
        %vm423 = vweird.f32 %v417
        %vm424 = vmor %vm422, %vm423
        %v425 = vsel %vm424, %v417, %v421
        %v426 = vand.u32 2147483647, %v416
        %vm427 = vcmp.eq.f32.partialorder %v426, 8.507059e+37
        %v428 = vand.u32 %v416, 2147483648
        %v429 = vor.u32 1.1754944e-38, %v428
        %v430 = vsel %vm427, %v429, %v425
        %v431 = vmul.f32 1.0, %v430
        %432 = vrot.lane.b32.xlu0 %v403, 64
        %v433 = vpop.permute.xlu0 %432
        %v435 = vadd.f32 %v409, %v433
        %437 = vrot.lane.b32.xlu0 %v435, 64
        %v438 = vpop.permute.xlu0 %437
        %v440 = vmul.f32 %v431, %v438
        %442 = vrot.lane.b32.xlu0 %v440, 64
        %v443 = vpop.permute.xlu0 %442
        %v445 = vadd.f32 %v411, %v443
        %v446 = vtanh.pop %v445
        %v447 = vsub.f32 1.0, %v431
        %449 = vrot.lane.b32.xlu0 %v446, 96
        %v450 = vpop.permute.xlu0 %449
        %v452 = vmul.f32 %v447, %v450
        %454 = vrot.lane.b32.xlu0 %v408, 32
        %v455 = vpop.permute.xlu0 %454
        %v457 = vmul.f32 %v431, %v455
        %v458 = vadd.f32 %v452, %v457
        %460 = vrot.lane.b32.xlu0 %v458, 96
        %v461 = vpop.permute.xlu0 %460
        %vm462 = vcmask 261120
        %v463 = vsel %vm462, %v461, 0
        %465 = vmatpush.msra.mxu0 0.0
        %466 = vmatpush.msra.mxu0 0.0
        %467 = vmatpush.msra.mxu0 0.0
        %468 = vmatpush.msra.mxu0 0.0
        %469 = vmatpush.msra.mxu0 0.0
        %470 = vmatpush.msra.mxu0 0.0
        %471 = vmatpush.msra.mxu0 0.0
        %472 = vmatpush.msra.mxu0 0.0
        %473 = vmatpush.msra.mxu0 0.0
        %474 = vmatpush.msra.mxu0 0.0
        %475 = vmatpush.msra.mxu0 0.0
        %476 = vmatpush.msra.mxu0 0.0
        %477 = vmatpush.msra.mxu0 %v399
        %478 = vmatpush.msra.mxu0 %v397
        %479 = vmatpush.msra.mxu0 %v395
        %480 = vmatpush.msra.mxu0 %v393
        %481 = vmatmul.f32.gmra.mxu0 %v463
        %v482 = vpop.f32.mrf.mxu0
        %v483 = vadd.f32 0.0, %v482
        %484 = vdwg.mxu0
        %485 = vmatpush.msra.mxu0 0.0
        %486 = vmatpush.msra.mxu0 0.0
        %487 = vmatpush.msra.mxu0 0.0
        %488 = vmatpush.msra.mxu0 0.0
        %489 = vmatpush.msra.mxu0 0.0
        %490 = vmatpush.msra.mxu0 0.0
        %491 = vmatpush.msra.mxu0 0.0
        %492 = vmatpush.msra.mxu0 0.0
        %493 = vmatpush.msra.mxu0 0.0
        %494 = vmatpush.msra.mxu0 0.0
        %495 = vmatpush.msra.mxu0 0.0
        %496 = vmatpush.msra.mxu0 0.0
        %497 = vmatpush.msra.mxu0 %v400
        %498 = vmatpush.msra.mxu0 %v398
        %499 = vmatpush.msra.mxu0 %v396
        %500 = vmatpush.msra.mxu0 %v394
        %501 = vmatmul.f32.gmra.mxu0 %v463
        %v502 = vpop.f32.mrf.mxu0
        %v503 = vadd.f32 0.0, %v502
        %504 = vdwg.mxu0
        %v505 = vadd.f32 %v503, %v406
        %506 = vst [vmem:[%s328] sm:$0xff] %v505
        %v507 = vld [vmem:[%s322] sm:$0xff]
        %v508 = vsub.f32 %v505, %v507
        %v509 = vmul.f32 %v508, %v508
        %v510 = vadd.f32 %v410, %v509
        %v511 = vld [vmem:[#allocation5 + $0x8] sm:$0xff]
        %v512 = vadd.f32 %v511, %v483
        %v513 = vxor.u32 %v512, 2147483648
        %v514 = vmul.f32 %v513, 1.442695
        %v515 = vpow.pop %v514
        %v516 = vadd.f32 %v515, 1.0
        %v517 = vrcp.pop %v516
        %v518 = vmul.f32 %v516, %v517
        %v519 = vsub.f32 1.0, %v518
        %v520 = vmul.f32 %v517, %v519
        %v521 = vadd.f32 %v517, %v520
        %vm522 = vweird.f32 %v516
        %vm523 = vweird.f32 %v517
        %vm524 = vmor %vm522, %vm523
        %v525 = vsel %vm524, %v517, %v521
        %v526 = vand.u32 2147483647, %v516
        %vm527 = vcmp.eq.f32.partialorder %v526, 8.507059e+37
        %v528 = vand.u32 %v516, 2147483648
        %v529 = vor.u32 1.1754944e-38, %v528
        %v530 = vsel %vm527, %v529, %v525
        %v531 = vmul.f32 1.0, %v530
        %v532 = vadd.f32 %v483, %v433
        %534 = vrot.lane.b32.xlu0 %v532, 64
        %v535 = vpop.permute.xlu0 %534
        %v537 = vmul.f32 %v531, %v535
        %539 = vrot.lane.b32.xlu0 %v537, 64
        %v540 = vpop.permute.xlu0 %539
        %v542 = vadd.f32 %v511, %v540
        %v543 = vtanh.pop %v542
        %v544 = vsub.f32 1.0, %v531
        %546 = vrot.lane.b32.xlu0 %v543, 96
        %v547 = vpop.permute.xlu0 %546
        %v549 = vmul.f32 %v544, %v547
        %v550 = vmul.f32 %v531, %v458
        %v551 = vadd.f32 %v549, %v550
        %553 = vrot.lane.b32.xlu0 %v551, 96
        %v554 = vpop.permute.xlu0 %553
        %v555 = vsel %vm462, %v554, 0
        %557 = vmatpush.msra.mxu0 0.0
        %558 = vmatpush.msra.mxu0 0.0
        %559 = vmatpush.msra.mxu0 0.0
        %560 = vmatpush.msra.mxu0 0.0
        %561 = vmatpush.msra.mxu0 0.0
        %562 = vmatpush.msra.mxu0 0.0
        %563 = vmatpush.msra.mxu0 0.0
        %564 = vmatpush.msra.mxu0 0.0
        %565 = vmatpush.msra.mxu0 0.0
        %566 = vmatpush.msra.mxu0 0.0
        %567 = vmatpush.msra.mxu0 0.0
        %568 = vmatpush.msra.mxu0 0.0
        %569 = vmatpush.msra.mxu0 %v399
        %570 = vmatpush.msra.mxu0 %v397
        %571 = vmatpush.msra.mxu0 %v395
        %572 = vmatpush.msra.mxu0 %v393
        %573 = vmatmul.f32.gmra.mxu0 %v555
        %v574 = vpop.f32.mrf.mxu0
        %v575 = vadd.f32 0.0, %v574
        %576 = vdwg.mxu0
        %577 = vmatpush.msra.mxu0 0.0
        %578 = vmatpush.msra.mxu0 0.0
        %579 = vmatpush.msra.mxu0 0.0
        %580 = vmatpush.msra.mxu0 0.0
        %581 = vmatpush.msra.mxu0 0.0
        %582 = vmatpush.msra.mxu0 0.0
        %583 = vmatpush.msra.mxu0 0.0
        %584 = vmatpush.msra.mxu0 0.0
        %585 = vmatpush.msra.mxu0 0.0
        %586 = vmatpush.msra.mxu0 0.0
        %587 = vmatpush.msra.mxu0 0.0
        %588 = vmatpush.msra.mxu0 0.0
        %589 = vmatpush.msra.mxu0 %v400
        %590 = vmatpush.msra.mxu0 %v398
        %591 = vmatpush.msra.mxu0 %v396
        %592 = vmatpush.msra.mxu0 %v394
        %593 = vmatmul.f32.gmra.mxu0 %v555
        %v594 = vpop.f32.mrf.mxu0
        %v595 = vadd.f32 0.0, %v594
        %596 = vdwg.mxu0
        %v597 = vadd.f32 %v595, %v406
        %598 = vst [vmem:[%s328 + $0x8] sm:$0xff] %v597
        %v599 = vld [vmem:[%s322 + $0x8] sm:$0xff]
        %v600 = vsub.f32 %v597, %v599
        %v601 = vmul.f32 %v600, %v600
        %v602 = vadd.f32 %v510, %v601
        %v603 = vld [vmem:[#allocation5 + $0x10] sm:$0xff]
        %v604 = vadd.f32 %v603, %v575
        %v605 = vxor.u32 %v604, 2147483648
        %v606 = vmul.f32 %v605, 1.442695
        %v607 = vpow.pop %v606
        %v608 = vadd.f32 %v607, 1.0
        %v609 = vrcp.pop %v608
        %v610 = vmul.f32 %v608, %v609
        %v611 = vsub.f32 1.0, %v610
        %v612 = vmul.f32 %v609, %v611
        %v613 = vadd.f32 %v609, %v612
        %vm614 = vweird.f32 %v608
        %vm615 = vweird.f32 %v609
        %vm616 = vmor %vm614, %vm615
        %v617 = vsel %vm616, %v609, %v613
        %v618 = vand.u32 2147483647, %v608
        %vm619 = vcmp.eq.f32.partialorder %v618, 8.507059e+37
        %v620 = vand.u32 %v608, 2147483648
        %v621 = vor.u32 1.1754944e-38, %v620
        %v622 = vsel %vm619, %v621, %v617
        %v623 = vmul.f32 1.0, %v622
        %v624 = vadd.f32 %v575, %v433
        %626 = vrot.lane.b32.xlu0 %v624, 64
        %v627 = vpop.permute.xlu0 %626
        %v629 = vmul.f32 %v623, %v627
        %631 = vrot.lane.b32.xlu0 %v629, 64
        %v632 = vpop.permute.xlu0 %631
        %v634 = vadd.f32 %v603, %v632
        %v635 = vtanh.pop %v634
        %v636 = vsub.f32 1.0, %v623
        %638 = vrot.lane.b32.xlu0 %v635, 96
        %v639 = vpop.permute.xlu0 %638
        %v641 = vmul.f32 %v636, %v639
        %v642 = vmul.f32 %v623, %v551
        %v643 = vadd.f32 %v641, %v642
        %645 = vrot.lane.b32.xlu0 %v643, 96
        %v646 = vpop.permute.xlu0 %645
        %v647 = vsel %vm462, %v646, 0
        %649 = vmatpush.msra.mxu0 0.0
        %650 = vmatpush.msra.mxu0 0.0
        %651 = vmatpush.msra.mxu0 0.0
        %652 = vmatpush.msra.mxu0 0.0
        %653 = vmatpush.msra.mxu0 0.0
        %654 = vmatpush.msra.mxu0 0.0
        %655 = vmatpush.msra.mxu0 0.0
        %656 = vmatpush.msra.mxu0 0.0
        %657 = vmatpush.msra.mxu0 0.0
        %658 = vmatpush.msra.mxu0 0.0
        %659 = vmatpush.msra.mxu0 0.0
        %660 = vmatpush.msra.mxu0 0.0
        %661 = vmatpush.msra.mxu0 %v399
        %662 = vmatpush.msra.mxu0 %v397
        %663 = vmatpush.msra.mxu0 %v395
        %664 = vmatpush.msra.mxu0 %v393
        %665 = vmatmul.f32.gmra.mxu0 %v647
        %v666 = vpop.f32.mrf.mxu0
        %v667 = vadd.f32 0.0, %v666
        %668 = vdwg.mxu0
        %669 = vmatpush.msra.mxu0 0.0
        %670 = vmatpush.msra.mxu0 0.0
        %671 = vmatpush.msra.mxu0 0.0
        %672 = vmatpush.msra.mxu0 0.0
        %673 = vmatpush.msra.mxu0 0.0
        %674 = vmatpush.msra.mxu0 0.0
        %675 = vmatpush.msra.mxu0 0.0
        %676 = vmatpush.msra.mxu0 0.0
        %677 = vmatpush.msra.mxu0 0.0
        %678 = vmatpush.msra.mxu0 0.0
        %679 = vmatpush.msra.mxu0 0.0
        %680 = vmatpush.msra.mxu0 0.0
        %681 = vmatpush.msra.mxu0 %v400
        %682 = vmatpush.msra.mxu0 %v398
        %683 = vmatpush.msra.mxu0 %v396
        %684 = vmatpush.msra.mxu0 %v394
        %685 = vmatmul.f32.gmra.mxu0 %v647
        %v686 = vpop.f32.mrf.mxu0
        %v687 = vadd.f32 0.0, %v686
        %688 = vdwg.mxu0
        %v689 = vadd.f32 %v687, %v406
        %690 = vst [vmem:[%s328 + $0x10] sm:$0xff] %v689
        %v691 = vld [vmem:[%s322 + $0x10] sm:$0xff]
        %v692 = vsub.f32 %v689, %v691
        %v693 = vmul.f32 %v692, %v692
        %v694 = vadd.f32 %v602, %v693
        %v695 = vld [vmem:[#allocation5 + $0x18] sm:$0xff]
        %v696 = vadd.f32 %v695, %v667
        %v697 = vxor.u32 %v696, 2147483648
        %v698 = vmul.f32 %v697, 1.442695
        %v699 = vpow.pop %v698
        %v700 = vadd.f32 %v699, 1.0
        %v701 = vrcp.pop %v700
        %v702 = vmul.f32 %v700, %v701
        %v703 = vsub.f32 1.0, %v702
        %v704 = vmul.f32 %v701, %v703
        %v705 = vadd.f32 %v701, %v704
        %vm706 = vweird.f32 %v700
        %vm707 = vweird.f32 %v701
        %vm708 = vmor %vm706, %vm707
        %v709 = vsel %vm708, %v701, %v705
        %v710 = vand.u32 2147483647, %v700
        %vm711 = vcmp.eq.f32.partialorder %v710, 8.507059e+37
        %v712 = vand.u32 %v700, 2147483648
        %v713 = vor.u32 1.1754944e-38, %v712
        %v714 = vsel %vm711, %v713, %v709
        %v715 = vmul.f32 1.0, %v714
        %v716 = vadd.f32 %v667, %v433
        %718 = vrot.lane.b32.xlu0 %v716, 64
        %v719 = vpop.permute.xlu0 %718
        %v721 = vmul.f32 %v715, %v719
        %723 = vrot.lane.b32.xlu0 %v721, 64
        %v724 = vpop.permute.xlu0 %723
        %v726 = vadd.f32 %v695, %v724
        %v727 = vtanh.pop %v726
        %v728 = vsub.f32 1.0, %v715
        %730 = vrot.lane.b32.xlu0 %v727, 96
        %v731 = vpop.permute.xlu0 %730
        %v733 = vmul.f32 %v728, %v731
        %v734 = vmul.f32 %v715, %v643
        %v735 = vadd.f32 %v733, %v734
        %737 = vrot.lane.b32.xlu0 %v735, 96
        %v738 = vpop.permute.xlu0 %737
        %v739 = vsel %vm462, %v738, 0
        %741 = vmatpush.msra.mxu0 0.0
        %742 = vmatpush.msra.mxu0 0.0
        %743 = vmatpush.msra.mxu0 0.0
        %744 = vmatpush.msra.mxu0 0.0
        %745 = vmatpush.msra.mxu0 0.0
        %746 = vmatpush.msra.mxu0 0.0
        %747 = vmatpush.msra.mxu0 0.0
        %748 = vmatpush.msra.mxu0 0.0
        %749 = vmatpush.msra.mxu0 0.0
        %750 = vmatpush.msra.mxu0 0.0
        %751 = vmatpush.msra.mxu0 0.0
        %752 = vmatpush.msra.mxu0 0.0
        %753 = vmatpush.msra.mxu0 %v399
        %754 = vmatpush.msra.mxu0 %v397
        %755 = vmatpush.msra.mxu0 %v395
        %756 = vmatpush.msra.mxu0 %v393
        %757 = vmatmul.f32.gmra.mxu0 %v739
        %v758 = vpop.f32.mrf.mxu0
        %v759 = vadd.f32 0.0, %v758
        %760 = vdwg.mxu0
        %761 = vmatpush.msra.mxu0 0.0
        %762 = vmatpush.msra.mxu0 0.0
        %763 = vmatpush.msra.mxu0 0.0
        %764 = vmatpush.msra.mxu0 0.0
        %765 = vmatpush.msra.mxu0 0.0
        %766 = vmatpush.msra.mxu0 0.0
        %767 = vmatpush.msra.mxu0 0.0
        %768 = vmatpush.msra.mxu0 0.0
        %769 = vmatpush.msra.mxu0 0.0
        %770 = vmatpush.msra.mxu0 0.0
        %771 = vmatpush.msra.mxu0 0.0
        %772 = vmatpush.msra.mxu0 0.0
        %773 = vmatpush.msra.mxu0 %v400
        %774 = vmatpush.msra.mxu0 %v398
        %775 = vmatpush.msra.mxu0 %v396
        %776 = vmatpush.msra.mxu0 %v394
        %777 = vmatmul.f32.gmra.mxu0 %v739
        %v778 = vpop.f32.mrf.mxu0
        %v779 = vadd.f32 0.0, %v778
        %780 = vdwg.mxu0
        %v781 = vadd.f32 %v779, %v406
        %782 = vst [vmem:[%s328 + $0x18] sm:$0xff] %v781
        %v783 = vld [vmem:[%s322 + $0x18] sm:$0xff]
        %v784 = vsub.f32 %v781, %v783
        %v785 = vmul.f32 %v784, %v784
        %s786 = smul.u32 %s21, 4
        %s787 = sadd.s32 %s786, 3
        %p788 = scmp.lt.s32.totalorder %s787, 7
        %s789 = scalar_select %p788, 1, 0
        %v790 = vstv %s789
        %vm791 = vcmp.eq.s32.totalorder %v790, 1
        %v792 = vsel %vm791, %v785, 0.0
        %v793 = vadd.f32 %v694, %v792
        %795 = vst.msk [vmem:[#allocation2] sm:$0xff] %vm462, %v738
        %796 = vst [vmem:[#allocation3] sm:$0xff] %v759
        %797 = vst [vmem:[#allocation4] sm:$0xff] %v793
        %p798 = scmp.eq.s32.totalorder %s21, 1
        // Predicated region
        $region53: #{encoder_net_forward.1} parent=47 // pred_check
          %p799 = pneg %p798
        $region54: #{encoder_net_forward.1} parent=47 // pred_check_branch
          %801 = sbr.rel (%p799) target = $region56
        $region55: #{encoder_net_forward.1} parent=47 // pred_region
          %802 = vadd.xlane.f32.xlu0 %v793
          %v803 = vpop.xlane.xlu0 %802
          %v804 = vrot.slane %v803, 4
          %v805 = vadd.f32 %v803, %v804
          %v806 = vrot.slane %v805, 2
          %v807 = vadd.f32 %v805, %v806
          %v808 = vrot.slane %v807, 1
          %v809 = vadd.f32 %v807, %v808
          %s810 = vtos %v809
          %v811 = vstv %s810
          %vm812 = vcmask 0
          %813 = vst.msk [vmem:[#allocation6] sm:$0x1] %vm812, %v811
        $region56: #{encoder_net_forward.1} parent=47 // pred_fallthru
          _
        %s814 = smul.u32 4, %s21
        %p815 = scmp.lt.s32.totalorder %s814, 7
        %s816 = scalar_select %p815, %s814, 7
        %s817 = smul.addr %s816, 8
        %s818 = scalar_lea.vmem %s7, %s817
        // Predicated region
        $region57: #{encoder_net_forward.1} parent=47 // pred_check
          %p819 = pneg %p196
        $region58: #{encoder_net_forward.1} parent=47 // pred_check_branch
          %821 = sbr.rel (%p819) target = $region60
        $region59: #{encoder_net_forward.1} parent=47 // pred_region
          %s822 = smul.u32 4, %s21
        $region60: #{encoder_net_forward.1} parent=47 // pred_fallthru
          _
        // Predicated region
        $region61: #{encoder_net_forward.1} parent=47 // pred_check
          %p823 = pneg %p217
        $region62: #{encoder_net_forward.1} parent=47 // pred_check_branch
          %825 = sbr.rel (%p823) target = $region64
        $region63: #{encoder_net_forward.1} parent=47 // pred_region
          %827 = vsyncadd [#allocation7], 0
          %s829 = sshll.u32 [#allocation6], 4
          %s830 = int_to_ptr.vmem [resolvable:$true] %s829
          %s831 = sshll.u32 %s8, 4
          %s832 = int_to_ptr.hbm [resolvable:$true] %s831
          %834 = dma.vmem_to_hbm [thread:$0]  %s830, 16, %s832, [#allocation7]
        $region64: #{encoder_net_forward.1} parent=47 // pred_fallthru
          _
        // Predicated region
        $region65: #{encoder_net_forward.1} parent=47 // pred_check
          %p835 = pneg %p217
        $region66: #{encoder_net_forward.1} parent=47 // pred_check_branch
          %837 = sbr.rel (%p835) target = $region68
        $region67: #{encoder_net_forward.1} parent=47 // pred_region
          %839 = dma.done [#allocation7], 16
        $region68: #{encoder_net_forward.1} parent=47 // pred_fallthru
          _
      $region48: #{encoder_net_forward.1} parent=5 // pred_fallthru
        _
      %p840 = scmp.le.s32.totalorder 2, %s16
      // Predicated region
      $region69: #{encoder_net_forward.1} parent=5 // pred_check
        %p841 = pneg %p840
      $region70: #{encoder_net_forward.1} parent=5 // pred_check_branch
        %843 = sbr.rel (%p841) target = $region72
      $region71: #{encoder_net_forward.1} parent=5 // pred_region
        %s844 = ssub.s32 %s16, 2
        // Predicated region
        $region73: #{encoder_net_forward.1} parent=71 // pred_check
          %p845 = pneg %p202
        $region74: #{encoder_net_forward.1} parent=71 // pred_check_branch
          %847 = sbr.rel (%p845) target = $region76
        $region75: #{encoder_net_forward.1} parent=71 // pred_region
          %s848 = smul.u32 4, %s22
          %p849 = scmp.lt.s32.totalorder %s848, 7
          %s850 = scalar_select %p849, %s848, 7
          %s851 = smul.addr %s850, 8
          %s852 = scalar_lea.vmem %s7, %s851
        $region76: #{encoder_net_forward.1} parent=71 // pred_fallthru
          _
      $region72: #{encoder_net_forward.1} parent=5 // pred_fallthru
        _
    $region6: #{encoder_net_forward.1} parent=1 // loop_footer
      %s20 = sadd.s32 1, %s16
    $region7: #{encoder_net_forward.1} parent=1 // loop_footer_branch
      %15 = sbr.rel target = $region3
    $region8: #{encoder_net_forward.1} parent=1 // loop_exit
      _
    %853 = vsyncpa [#allocation7], 1
    %s854 = scalar_lea.sflag [#allocation7], 1
    %855 = vsyncpa %s854, 1

</llo_original>
